<compile_context>
chip_gen: v6e
topology: v6e:2x2x1
jax: 0.10.0
libtpu: 0.0.40
codegen_flags: <defaults>
</compile_context>

<pallas_src>
import functools

import jax
import jax.numpy as jnp
import numpy as np
from jax.experimental import pallas as pl
from jax.experimental.pallas import tpu as pltpu


def _dino_fused_kernel(inv_temp_ref, teacher_ref, center_ref, student_ref,
                       loss_ref, new_center_ref,
                       m_t_ref, z_t_ref, m_s_ref, z_s_ref, c0_ref, c1_ref, *,
                       ncrops, batch, inv_student_temp, center_momentum,
                       inv_n_teacher_rows):
    """Single streaming pass over D tiles: teacher online logsumexp + center EMA
    + student online logsumexp + rescaled per-(view, crop) dot accumulators."""
    k = pl.program_id(0)
    nk = pl.num_programs(0)

    @pl.when(k == 0)
    def _init():
        m_t_ref[...] = jnp.full(m_t_ref.shape, -jnp.inf, dtype=jnp.float32)
        z_t_ref[...] = jnp.zeros(z_t_ref.shape, dtype=jnp.float32)
        m_s_ref[...] = jnp.full(m_s_ref.shape, -jnp.inf, dtype=jnp.float32)
        z_s_ref[...] = jnp.zeros(z_s_ref.shape, dtype=jnp.float32)
        c0_ref[...] = jnp.zeros(c0_ref.shape, dtype=jnp.float32)
        c1_ref[...] = jnp.zeros(c1_ref.shape, dtype=jnp.float32)

    inv_temp = inv_temp_ref[0]

    # ---- teacher: centered / temp-scaled logits, online logsumexp -----------
    t_raw = teacher_ref[...].astype(jnp.float32)              # (2B, Dt)
    c = center_ref[...].astype(jnp.float32)                   # (1, Dt)

    # Center EMA contribution of this D tile (independent of streaming state).
    # dist.all_reduce / world_size of the PyTorch module is identity here.
    batch_center = jnp.sum(t_raw, axis=0, keepdims=True) * inv_n_teacher_rows
    new_center_ref[...] = (c * center_momentum
                           + batch_center * (1.0 - center_momentum))

    t = (t_raw - c) * inv_temp
    tile_max_t = jnp.max(t, axis=-1, keepdims=True)            # (2B, 1)
    m_t_new = jnp.maximum(m_t_ref[...], tile_max_t)
    alpha_t = jnp.exp(m_t_ref[...] - m_t_new)                  # (2B, 1) rescale
    p_t = jnp.exp(t - m_t_new)                                 # unnormalized q
    z_t_ref[...] = z_t_ref[...] * alpha_t + jnp.sum(p_t, axis=-1, keepdims=True)
    m_t_ref[...] = m_t_new

    # ---- student: scaled logits, online logsumexp ----------------------------
    s = student_ref[...].astype(jnp.float32) * inv_student_temp  # (ncrops*B, Dt)
    tile_max_s = jnp.max(s, axis=-1, keepdims=True)
    m_s_new = jnp.maximum(m_s_ref[...], tile_max_s)
    z_s_ref[...] = (z_s_ref[...] * jnp.exp(m_s_ref[...] - m_s_new)
                    + jnp.sum(jnp.exp(s - m_s_new), axis=-1, keepdims=True))
    m_s_ref[...] = m_s_new

    # ---- per-(teacher view, student crop) running dot products --------------
    # sum_d(q*s) is accumulated unnormalized (flash style): rescale when the
    # teacher row max changes, divide by z at finalize.  Crop 0 pairs with view 1
    # only, crop 1 with view 0 only, crops >= 2 with both; unused rows stay zero.
    # One concatenated (ncrops*B, 1) update => one store per accumulator per tile.
    p0, p1 = p_t[:batch, :], p_t[batch:, :]
    a0, a1 = alpha_t[:batch, :], alpha_t[batch:, :]
    zeros_col = jnp.zeros((batch, 1), dtype=jnp.float32)
    d0_parts, d1_parts = [], []
    for v in range(ncrops):
        sv = s[v * batch:(v + 1) * batch, :]
        d0_parts.append(zeros_col if v == 0
                        else jnp.sum(p0 * sv, axis=-1, keepdims=True))
        d1_parts.append(zeros_col if v == 1
                        else jnp.sum(p1 * sv, axis=-1, keepdims=True))
    d0 = jnp.concatenate(d0_parts, axis=0)                     # (ncrops*B, 1)
    d1 = jnp.concatenate(d1_parts, axis=0)
    a0_full = jnp.concatenate([a0] * ncrops, axis=0)
    a1_full = jnp.concatenate([a1] * ncrops, axis=0)
    c0_ref[...] = c0_ref[...] * a0_full + d0
    c1_ref[...] = c1_ref[...] * a1_full + d1

    @pl.when(k == nk - 1)
    def _finalize():
        lse_s = m_s_ref[...] + jnp.log(z_s_ref[...])           # (ncrops*B, 1)
        z_t = z_t_ref[...]
        z0_full = jnp.concatenate([z_t[:batch, :]] * ncrops, axis=0)
        z1_full = jnp.concatenate([z_t[batch:, :]] * ncrops, axis=0)
        # sum_d(-q*log_softmax(s)) = lse(s) - sum_d(q*s)   (rows of q sum to 1).
        q_dot = c0_ref[...] / z0_full + c1_ref[...] / z1_full
        row = jax.lax.broadcasted_iota(jnp.int32, lse_s.shape, 0)
        w = jnp.where(row < 2 * batch, 1.0, 2.0)  # crops >= 2 pair with both views
        n_terms = 2 * (ncrops - 1)
        total = jnp.sum(w * lse_s - q_dot)
        loss_ref[0, 0] = total * (1.0 / (n_terms * batch))


def _vmem_capacity_bytes():
    """Per-TensorCore VMEM capacity; conservative 64 MiB (v7x) fallback."""
    try:
        info = pltpu.get_tpu_info()
        cap = int(getattr(info, "vmem_capacity_bytes", 0) or 0)
        if cap > 0:
            return cap
    except Exception:
        pass
    return 64 * 1024 * 1024


def _pick_block_d(d, rows_s, two_b, student_itemsize, vmem_budget_bytes):
    """Largest D tile (multiple of 128 dividing d) whose double-buffered tiles plus
    in-kernel f32 working set fit the VMEM budget.  Picks ~8192 on v5e/v6e and
    ~4096 on v7x at production shapes (B=64, ncrops=10, bf16 student)."""
    smallest = None
    for cand in (8192, 4096, 2048, 1024, 512, 256, 128):
        if cand > d or d % cand != 0:
            continue
        smallest = cand
        pipelined = 2 * (rows_s * cand * student_itemsize     # student (double buf)
                         + two_b * cand * 4                   # teacher f32
                         + 2 * cand * 4)                      # center in + out
        temps = int(2.5 * (rows_s + two_b) * cand * 4)        # f32 temporaries
        if pipelined + temps <= vmem_budget_bytes:
            return cand
    if smallest is not None:
        return smallest
    return d                                                  # single full-extent tile


def dino_loss(student_output, teacher_output, center, epoch, *,
              ncrops, teacher_temp_schedule,
              student_temp=0.1, center_momentum=0.9,
              block_d=None, input_dtype=None, vmem_limit_bytes=None):
    """DINO loss forward.  Returns (scalar loss, updated center (1, D)).

    `epoch` must be a static Python int (it indexes the host-side numpy
    temperature schedule, exactly as in the PyTorch module).

    For production out_dim=65536 pass input_dtype=jnp.bfloat16: it halves the
    dominant (student) HBM stream while teacher/center stay float32 so the
    long-lived center EMA and the teacher softmax remain exact.  Keep batch a
    multiple of 8 so per-crop row slices land on (8, 128) tile boundaries.
    """
    two_b, d = teacher_output.shape
    batch = two_b // 2
    assert two_b == 2 * batch, "teacher_output must hold exactly 2 crops"
    assert student_output.shape == (ncrops * batch, d)
    assert ncrops >= 2
    assert batch % 8 == 0, "batch must be a multiple of 8 (sublane tiling)"
    rows_s = ncrops * batch

    # Teacher & center stay f32 (exact center EMA + exact teacher softmax);
    # only the student stream is optionally narrowed.
    teacher_output = teacher_output.astype(jnp.float32)
    center = center.astype(jnp.float32)
    if input_dtype is not None:
        student_output = student_output.astype(input_dtype)

    # Generation-aware VMEM budgeting (v5e/v6e: 128 MiB, v7x: 64 MiB per TC).
    cap = _vmem_capacity_bytes()
    if vmem_limit_bytes is None:
        vmem_limit_bytes = min(int(0.85 * cap), 96 * 1024 * 1024)
    vmem_budget = min(int(0.70 * cap), vmem_limit_bytes)

    student_itemsize = jnp.dtype(student_output.dtype).itemsize
    if block_d is None:
        block_d = _pick_block_d(d, rows_s, two_b, student_itemsize, vmem_budget)
    assert d % block_d == 0, "block_d must divide out_dim"
    if block_d != d:
        assert block_d % 128 == 0, "block_d must be a multiple of 128"
    nk = d // block_d

    temp = float(teacher_temp_schedule[int(epoch)])
    inv_temp = jnp.asarray([1.0 / temp], dtype=jnp.float32)

    kernel = functools.partial(
        _dino_fused_kernel,
        ncrops=ncrops, batch=batch,
        inv_student_temp=float(1.0 / student_temp),
        center_momentum=float(center_momentum),
        inv_n_teacher_rows=float(1.0 / two_b))

    smem_spec = pl.BlockSpec(memory_space=pltpu.MemorySpace.SMEM)
    teacher_spec = pl.BlockSpec((two_b, block_d), lambda k: (0, k))
    center_spec = pl.BlockSpec((1, block_d), lambda k: (0, k))
    student_spec = pl.BlockSpec((rows_s, block_d), lambda k: (0, k))

    loss, new_center = pl.pallas_call(
        kernel,
        grid=(nk,),
        out_shape=(jax.ShapeDtypeStruct((1, 1), jnp.float32),
                   jax.ShapeDtypeStruct((1, d), jnp.float32)),
        in_specs=[smem_spec, teacher_spec, center_spec, student_spec],
        out_specs=(smem_spec,
                   pl.BlockSpec((1, block_d), lambda k: (0, k))),
        scratch_shapes=[pltpu.VMEM((two_b, 1), jnp.float32),   # m_t
                        pltpu.VMEM((two_b, 1), jnp.float32),   # z_t
                        pltpu.VMEM((rows_s, 1), jnp.float32),  # m_s
                        pltpu.VMEM((rows_s, 1), jnp.float32),  # z_s
                        pltpu.VMEM((rows_s, 1), jnp.float32),  # c0 (vs teacher view 0)
                        pltpu.VMEM((rows_s, 1), jnp.float32)], # c1 (vs teacher view 1)
        compiler_params=pltpu.CompilerParams(
            dimension_semantics=("arbitrary",),   # streaming reduction over D tiles
            vmem_limit_bytes=vmem_limit_bytes),
    )(inv_temp, teacher_output, center, student_output)

    return loss[0, 0], new_center


def _reference(student_output, teacher_output, center, temp,
               ncrops, student_temp, center_momentum):
    """Pure-JAX reference mirroring the PyTorch forward."""
    batch = teacher_output.shape[0] // 2
    student_out = student_output / student_temp
    teacher_out = jax.nn.softmax((teacher_output - center) / temp, axis=-1)
    total, n_terms = 0.0, 0
    for iq in range(2):
        q = teacher_out[iq * batch:(iq + 1) * batch]
        for v in range(ncrops):
            if v == iq:
                continue
            lp = jax.nn.log_softmax(
                student_out[v * batch:(v + 1) * batch], axis=-1)
            total += jnp.mean(jnp.sum(-q * lp, axis=-1))
            n_terms += 1
    total = total / n_terms
    batch_center = (jnp.sum(teacher_output, axis=0, keepdims=True)
                    / teacher_output.shape[0])
    new_center = center * center_momentum + batch_center * (1 - center_momentum)
    return total, new_center


if __name__ == "__main__":
    # Small, TPU-friendly shapes (production out_dim is 65536); block_d=128 forces
    # several D tiles so the streaming / rescaled-accumulator path is exercised.
    out_dim = 512
    ncrops = 4
    batch = 8
    nepochs = 10
    warmup_teacher_temp = 0.04
    teacher_temp = 0.04
    warmup_teacher_temp_epochs = 0
    student_temp = 0.1
    center_momentum = 0.9

    teacher_temp_schedule = np.concatenate((
        np.linspace(warmup_teacher_temp, teacher_temp, warmup_teacher_temp_epochs),
        np.ones(nepochs - warmup_teacher_temp_epochs) * teacher_temp,
    ))

    key = jax.random.PRNGKey(0)
    k1, k2 = jax.random.split(key)
    student_output = jax.random.normal(k1, (ncrops * batch, out_dim),
                                       dtype=jnp.float32)
    teacher_output = jax.random.normal(k2, (2 * batch, out_dim),
                                       dtype=jnp.float32)
    center = jnp.zeros((1, out_dim), dtype=jnp.float32)   # registered buffer init
    epoch = 0

    ref_loss, ref_center = _reference(
        student_output, teacher_output, center,
        float(teacher_temp_schedule[epoch]),
        ncrops, student_temp, center_momentum)

    # ---- float32, multi-tile streaming path (nk = 4) ------------------------
    loss, new_center = dino_loss(
        student_output, teacher_output, center, epoch,
        ncrops=ncrops, teacher_temp_schedule=teacher_temp_schedule,
        student_temp=student_temp, center_momentum=center_momentum,
        block_d=128)
    jax.block_until_ready((loss, new_center))
    np.testing.assert_allclose(np.asarray(loss), np.asarray(ref_loss),
                               rtol=2e-5, atol=2e-4)
    np.testing.assert_allclose(np.asarray(new_center), np.asarray(ref_center),
                               rtol=1e-5, atol=1e-6)

    # ---- float32, auto block_d (single tile here; exercises nk == 1) --------
    loss1, center1 = dino_loss(
        student_output, teacher_output, center, epoch,
        ncrops=ncrops, teacher_temp_schedule=teacher_temp_schedule,
        student_temp=student_temp, center_momentum=center_momentum)
    jax.block_until_ready((loss1, center1))
    np.testing.assert_allclose(np.asarray(loss1), np.asarray(ref_loss),
                               rtol=2e-5, atol=2e-4)
    np.testing.assert_allclose(np.asarray(center1), np.asarray(ref_center),
                               rtol=1e-5, atol=1e-6)

    # ---- bf16 student path (production recommendation) ----------------------
    loss16, center16 = dino_loss(
        student_output, teacher_output, center, epoch,
        ncrops=ncrops, teacher_temp_schedule=teacher_temp_schedule,
        student_temp=student_temp, center_momentum=center_momentum,
        block_d=128, input_dtype=jnp.bfloat16)
    jax.block_until_ready((loss16, center16))

    s16 = student_output.astype(jnp.bfloat16).astype(jnp.float32)
    ref_loss16, ref_center16 = _reference(
        s16, teacher_output, center, float(teacher_temp_schedule[epoch]),
        ncrops, student_temp, center_momentum)
    np.testing.assert_allclose(np.asarray(loss16), np.asarray(ref_loss16),
                               rtol=1e-4, atol=1e-3)
    # Teacher stays f32 in the kernel, so the center EMA remains exact.
    np.testing.assert_allclose(np.asarray(center16), np.asarray(ref_center16),
                               rtol=1e-5, atol=1e-6)

    print("KERNEL_OK")
</pallas_src>

<mosaic_0001>
module attributes {stable_mosaic.version = 11 : i64} {
  func.func @_dino_fused_kernel(%arg0: i32, %arg1: memref<1xf32, #tpu.memory_space<smem>>, %arg2: memref<16x128xf32, #tpu.memory_space<vmem>>, %arg3: memref<1x128xf32, #tpu.memory_space<vmem>>, %arg4: memref<32x128xf32, #tpu.memory_space<vmem>>, %arg5: memref<1x1xf32, #tpu.memory_space<smem>>, %arg6: memref<1x128xf32, #tpu.memory_space<vmem>>, %arg7: memref<16x1xf32, #tpu.memory_space<vmem>>, %arg8: memref<16x1xf32, #tpu.memory_space<vmem>>, %arg9: memref<32x1xf32, #tpu.memory_space<vmem>>, %arg10: memref<32x1xf32, #tpu.memory_space<vmem>>, %arg11: memref<32x1xf32, #tpu.memory_space<vmem>>, %arg12: memref<32x1xf32, #tpu.memory_space<vmem>>) attributes {dimension_semantics = [#tpu.dimension_semantics<arbitrary>], iteration_bounds = array<i64: 4>, scalar_prefetch = 0 : i64, scratch_operands = 6 : i64, tpu.core_type = #tpu.core_type<tc>, window_params = [{transform_indices = @transform_0, window_bounds = array<i64: 1>}, {transform_indices = @transform_1, window_bounds = array<i64: 16, 128>}, {transform_indices = @transform_2, window_bounds = array<i64: 1, 128>}, {transform_indices = @transform_3, window_bounds = array<i64: 32, 128>}, {transform_indices = @transform_4, window_bounds = array<i64: 1, 1>}, {transform_indices = @transform_5, window_bounds = array<i64: 1, 128>}]} {
    %c0_i32 = arith.constant 0 : i32
    %0 = arith.cmpi eq, %arg0, %c0_i32 : i32
    %1 = arith.extui %0 : i1 to i32
    %c0_i32_0 = arith.constant 0 : i32
    %2 = arith.cmpi ne, %1, %c0_i32_0 : i32
    scf.if %2 {
      %cst_53 = arith.constant 0xFF800000 : f32
      %99 = vector.broadcast %cst_53 : f32 to vector<16x1xf32>
      %c0_54 = arith.constant 0 : index
      %c0_55 = arith.constant 0 : index
      %100 = vector.load %arg7[%c0_54, %c0_55] : memref<16x1xf32, #tpu.memory_space<vmem>>, vector<16x1xf32>
      tpu.vector_store %arg7[%c0_54, %c0_55], %99 {strides = array<i32>} : memref<16x1xf32, #tpu.memory_space<vmem>>, vector<16x1xf32>,
      %cst_56 = arith.constant 0.000000e+00 : f32
      %101 = vector.broadcast %cst_56 : f32 to vector<16x1xf32>
      %c0_57 = arith.constant 0 : index
      %c0_58 = arith.constant 0 : index
      %102 = vector.load %arg8[%c0_57, %c0_58] : memref<16x1xf32, #tpu.memory_space<vmem>>, vector<16x1xf32>
      tpu.vector_store %arg8[%c0_57, %c0_58], %101 {strides = array<i32>} : memref<16x1xf32, #tpu.memory_space<vmem>>, vector<16x1xf32>,
      %cst_59 = arith.constant 0xFF800000 : f32
      %103 = vector.broadcast %cst_59 : f32 to vector<32x1xf32>
      %c0_60 = arith.constant 0 : index
      %c0_61 = arith.constant 0 : index
      %104 = vector.load %arg9[%c0_60, %c0_61] : memref<32x1xf32, #tpu.memory_space<vmem>>, vector<32x1xf32>
      tpu.vector_store %arg9[%c0_60, %c0_61], %103 {strides = array<i32>} : memref<32x1xf32, #tpu.memory_space<vmem>>, vector<32x1xf32>,
      %cst_62 = arith.constant 0.000000e+00 : f32
      %105 = vector.broadcast %cst_62 : f32 to vector<32x1xf32>
      %c0_63 = arith.constant 0 : index
      %c0_64 = arith.constant 0 : index
      %106 = vector.load %arg10[%c0_63, %c0_64] : memref<32x1xf32, #tpu.memory_space<vmem>>, vector<32x1xf32>
      tpu.vector_store %arg10[%c0_63, %c0_64], %105 {strides = array<i32>} : memref<32x1xf32, #tpu.memory_space<vmem>>, vector<32x1xf32>,
      %cst_65 = arith.constant 0.000000e+00 : f32
      %107 = vector.broadcast %cst_65 : f32 to vector<32x1xf32>
      %c0_66 = arith.constant 0 : index
      %c0_67 = arith.constant 0 : index
      %108 = vector.load %arg11[%c0_66, %c0_67] : memref<32x1xf32, #tpu.memory_space<vmem>>, vector<32x1xf32>
      tpu.vector_store %arg11[%c0_66, %c0_67], %107 {strides = array<i32>} : memref<32x1xf32, #tpu.memory_space<vmem>>, vector<32x1xf32>,
      %cst_68 = arith.constant 0.000000e+00 : f32
      %109 = vector.broadcast %cst_68 : f32 to vector<32x1xf32>
      %c0_69 = arith.constant 0 : index
      %c0_70 = arith.constant 0 : index
      %110 = vector.load %arg12[%c0_69, %c0_70] : memref<32x1xf32, #tpu.memory_space<vmem>>, vector<32x1xf32>
      tpu.vector_store %arg12[%c0_69, %c0_70], %109 {strides = array<i32>} : memref<32x1xf32, #tpu.memory_space<vmem>>, vector<32x1xf32>,
    } else {
    }
    %c0 = arith.constant 0 : index
    %3 = memref.load %arg1[%c0] : memref<1xf32, #tpu.memory_space<smem>>
    %c0_1 = arith.constant 0 : index
    %c0_2 = arith.constant 0 : index
    %4 = vector.load %arg2[%c0_1, %c0_2] : memref<16x128xf32, #tpu.memory_space<vmem>>, vector<16x128xf32>
    %c0_3 = arith.constant 0 : index
    %c0_4 = arith.constant 0 : index
    %5 = vector.load %arg3[%c0_3, %c0_4] : memref<1x128xf32, #tpu.memory_space<vmem>>, vector<1x128xf32>
    %cst = arith.constant dense<0.000000e+00> : vector<128xf32>
    %6 = vector.multi_reduction <add>, %4, %cst [0] : vector<16x128xf32> to vector<128xf32>
    %7 = vector.shape_cast %6 : vector<128xf32> to vector<1x128xf32>
    %cst_5 = arith.constant 6.250000e-02 : f32
    %8 = vector.broadcast %cst_5 : f32 to vector<1x128xf32>
    %9 = arith.mulf %7, %8 : vector<1x128xf32>
    %cst_6 = arith.constant 0.899999976 : f32
    %10 = vector.broadcast %cst_6 : f32 to vector<1x128xf32>
    %11 = arith.mulf %5, %10 : vector<1x128xf32>
    %cst_7 = arith.constant 1.000000e-01 : f32
    %12 = vector.broadcast %cst_7 : f32 to vector<1x128xf32>
    %13 = arith.mulf %9, %12 : vector<1x128xf32>
    %14 = arith.addf %11, %13 : vector<1x128xf32>
    %c0_8 = arith.constant 0 : index
    %c0_9 = arith.constant 0 : index
    %15 = vector.load %arg6[%c0_8, %c0_9] : memref<1x128xf32, #tpu.memory_space<vmem>>, vector<1x128xf32>
    tpu.vector_store %arg6[%c0_8, %c0_9], %14 {strides = array<i32>} : memref<1x128xf32, #tpu.memory_space<vmem>>, vector<1x128xf32>,
    %16 = vector.broadcast %5 : vector<1x128xf32> to vector<16x128xf32>
    %17 = arith.subf %4, %16 : vector<16x128xf32>
    %18 = vector.broadcast %3 : f32 to vector<16x128xf32>
    %19 = arith.mulf %17, %18 : vector<16x128xf32>
    %cst_10 = arith.constant dense<0xFF800000> : vector<16xf32>
    %20 = vector.multi_reduction <maximumf>, %19, %cst_10 [1] : vector<16x128xf32> to vector<16xf32>
    %21 = vector.shape_cast %20 : vector<16xf32> to vector<16x1xf32>
    %c0_11 = arith.constant 0 : index
    %c0_12 = arith.constant 0 : index
    %22 = vector.load %arg7[%c0_11, %c0_12] : memref<16x1xf32, #tpu.memory_space<vmem>>, vector<16x1xf32>
    %23 = arith.maximumf %22, %21 : vector<16x1xf32>
    %c0_13 = arith.constant 0 : index
    %c0_14 = arith.constant 0 : index
    %24 = vector.load %arg7[%c0_13, %c0_14] : memref<16x1xf32, #tpu.memory_space<vmem>>, vector<16x1xf32>
    %25 = arith.subf %24, %23 : vector<16x1xf32>
    %26 = math.exp %25 : vector<16x1xf32>
    %27 = vector.broadcast %23 : vector<16x1xf32> to vector<16x128xf32>
    %28 = arith.subf %19, %27 : vector<16x128xf32>
    %29 = math.exp %28 : vector<16x128xf32>
    %c0_15 = arith.constant 0 : index
    %c0_16 = arith.constant 0 : index
    %30 = vector.load %arg8[%c0_15, %c0_16] : memref<16x1xf32, #tpu.memory_space<vmem>>, vector<16x1xf32>
    %31 = arith.mulf %30, %26 : vector<16x1xf32>
    %cst_17 = arith.constant dense<0.000000e+00> : vector<16xf32>
    %32 = vector.multi_reduction <add>, %29, %cst_17 [1] : vector<16x128xf32> to vector<16xf32>
    %33 = vector.shape_cast %32 : vector<16xf32> to vector<16x1xf32>
    %34 = arith.addf %31, %33 : vector<16x1xf32>
    %c0_18 = arith.constant 0 : index
    %c0_19 = arith.constant 0 : index
    %35 = vector.load %arg8[%c0_18, %c0_19] : memref<16x1xf32, #tpu.memory_space<vmem>>, vector<16x1xf32>
    tpu.vector_store %arg8[%c0_18, %c0_19], %34 {strides = array<i32>} : memref<16x1xf32, #tpu.memory_space<vmem>>, vector<16x1xf32>,
    %c0_20 = arith.constant 0 : index
    %c0_21 = arith.constant 0 : index
    %36 = vector.load %arg7[%c0_20, %c0_21] : memref<16x1xf32, #tpu.memory_space<vmem>>, vector<16x1xf32>
    tpu.vector_store %arg7[%c0_20, %c0_21], %23 {strides = array<i32>} : memref<16x1xf32, #tpu.memory_space<vmem>>, vector<16x1xf32>,
    %c0_22 = arith.constant 0 : index
    %c0_23 = arith.constant 0 : index
    %37 = vector.load %arg4[%c0_22, %c0_23] : memref<32x128xf32, #tpu.memory_space<vmem>>, vector<32x128xf32>
    %cst_24 = arith.constant 1.000000e+01 : f32
    %38 = vector.broadcast %cst_24 : f32 to vector<32x128xf32>
    %39 = arith.mulf %37, %38 : vector<32x128xf32>
    %cst_25 = arith.constant dense<0xFF800000> : vector<32xf32>
    %40 = vector.multi_reduction <maximumf>, %39, %cst_25 [1] : vector<32x128xf32> to vector<32xf32>
    %41 = vector.shape_cast %40 : vector<32xf32> to vector<32x1xf32>
    %c0_26 = arith.constant 0 : index
    %c0_27 = arith.constant 0 : index
    %42 = vector.load %arg9[%c0_26, %c0_27] : memref<32x1xf32, #tpu.memory_space<vmem>>, vector<32x1xf32>
    %43 = arith.maximumf %42, %41 : vector<32x1xf32>
    %c0_28 = arith.constant 0 : index
    %c0_29 = arith.constant 0 : index
    %44 = vector.load %arg10[%c0_28, %c0_29] : memref<32x1xf32, #tpu.memory_space<vmem>>, vector<32x1xf32>
    %c0_30 = arith.constant 0 : index
    %c0_31 = arith.constant 0 : index
    %45 = vector.load %arg9[%c0_30, %c0_31] : memref<32x1xf32, #tpu.memory_space<vmem>>, vector<32x1xf32>
    %46 = arith.subf %45, %43 : vector<32x1xf32>
    %47 = math.exp %46 : vector<32x1xf32>
    %48 = arith.mulf %44, %47 : vector<32x1xf32>
    %49 = vector.broadcast %43 : vector<32x1xf32> to vector<32x128xf32>
    %50 = arith.subf %39, %49 : vector<32x128xf32>
    %51 = math.exp %50 : vector<32x128xf32>
    %cst_32 = arith.constant dense<0.000000e+00> : vector<32xf32>
    %52 = vector.multi_reduction <add>, %51, %cst_32 [1] : vector<32x128xf32> to vector<32xf32>
    %53 = vector.shape_cast %52 : vector<32xf32> to vector<32x1xf32>
    %54 = arith.addf %48, %53 : vector<32x1xf32>
    %c0_33 = arith.constant 0 : index
    %c0_34 = arith.constant 0 : index
    %55 = vector.load %arg10[%c0_33, %c0_34] : memref<32x1xf32, #tpu.memory_space<vmem>>, vector<32x1xf32>
    tpu.vector_store %arg10[%c0_33, %c0_34], %54 {strides = array<i32>} : memref<32x1xf32, #tpu.memory_space<vmem>>, vector<32x1xf32>,
    %c0_35 = arith.constant 0 : index
    %c0_36 = arith.constant 0 : index
    %56 = vector.load %arg9[%c0_35, %c0_36] : memref<32x1xf32, #tpu.memory_space<vmem>>, vector<32x1xf32>
    tpu.vector_store %arg9[%c0_35, %c0_36], %43 {strides = array<i32>} : memref<32x1xf32, #tpu.memory_space<vmem>>, vector<32x1xf32>,
    %57 = vector.extract_strided_slice %29 {offsets = [0, 0], sizes = [8, 128], strides = [1, 1]} : vector<16x128xf32> to vector<8x128xf32>
    %58 = vector.extract_strided_slice %29 {offsets = [8, 0], sizes = [8, 128], strides = [1, 1]} : vector<16x128xf32> to vector<8x128xf32>
    %59 = vector.extract_strided_slice %26 {offsets = [0, 0], sizes = [8, 1], strides = [1, 1]} : vector<16x1xf32> to vector<8x1xf32>
    %60 = vector.extract_strided_slice %26 {offsets = [8, 0], sizes = [8, 1], strides = [1, 1]} : vector<16x1xf32> to vector<8x1xf32>
    %cst_37 = arith.constant 0.000000e+00 : f32
    %61 = vector.broadcast %cst_37 : f32 to vector<8x1xf32>
    %62 = vector.extract_strided_slice %39 {offsets = [0, 0], sizes = [8, 128], strides = [1, 1]} : vector<32x128xf32> to vector<8x128xf32>
    %63 = arith.mulf %58, %62 : vector<8x128xf32>
    %cst_38 = arith.constant dense<0.000000e+00> : vector<8xf32>
    %64 = vector.multi_reduction <add>, %63, %cst_38 [1] : vector<8x128xf32> to vector<8xf32>
    %65 = vector.shape_cast %64 : vector<8xf32> to vector<8x1xf32>
    %66 = vector.extract_strided_slice %39 {offsets = [8, 0], sizes = [8, 128], strides = [1, 1]} : vector<32x128xf32> to vector<8x128xf32>
    %67 = arith.mulf %57, %66 : vector<8x128xf32>
    %cst_39 = arith.constant dense<0.000000e+00> : vector<8xf32>
    %68 = vector.multi_reduction <add>, %67, %cst_39 [1] : vector<8x128xf32> to vector<8xf32>
    %69 = vector.shape_cast %68 : vector<8xf32> to vector<8x1xf32>
    %70 = vector.extract_strided_slice %39 {offsets = [16, 0], sizes = [8, 128], strides = [1, 1]} : vector<32x128xf32> to vector<8x128xf32>
    %71 = arith.mulf %57, %70 : vector<8x128xf32>
    %cst_40 = arith.constant dense<0.000000e+00> : vector<8xf32>
    %72 = vector.multi_reduction <add>, %71, %cst_40 [1] : vector<8x128xf32> to vector<8xf32>
    %73 = vector.shape_cast %72 : vector<8xf32> to vector<8x1xf32>
    %74 = arith.mulf %58, %70 : vector<8x128xf32>
    %cst_41 = arith.constant dense<0.000000e+00> : vector<8xf32>
    %75 = vector.multi_reduction <add>, %74, %cst_41 [1] : vector<8x128xf32> to vector<8xf32>
    %76 = vector.shape_cast %75 : vector<8xf32> to vector<8x1xf32>
    %77 = vector.extract_strided_slice %39 {offsets = [24, 0], sizes = [8, 128], strides = [1, 1]} : vector<32x128xf32> to vector<8x128xf32>
    %78 = arith.mulf %57, %77 : vector<8x128xf32>
    %cst_42 = arith.constant dense<0.000000e+00> : vector<8xf32>
    %79 = vector.multi_reduction <add>, %78, %cst_42 [1] : vector<8x128xf32> to vector<8xf32>
    %80 = vector.shape_cast %79 : vector<8xf32> to vector<8x1xf32>
    %81 = arith.mulf %58, %77 : vector<8x128xf32>
    %cst_43 = arith.constant dense<0.000000e+00> : vector<8xf32>
    %82 = vector.multi_reduction <add>, %81, %cst_43 [1] : vector<8x128xf32> to vector<8xf32>
    %83 = vector.shape_cast %82 : vector<8xf32> to vector<8x1xf32>
    %84 = tpu.concatenate %61, %69, %73, %80 in 0 : vector<8x1xf32>, vector<8x1xf32>, vector<8x1xf32>, vector<8x1xf32> -> vector<32x1xf32>
    %85 = tpu.concatenate %65, %61, %76, %83 in 0 : vector<8x1xf32>, vector<8x1xf32>, vector<8x1xf32>, vector<8x1xf32> -> vector<32x1xf32>
    %86 = tpu.concatenate %59, %59, %59, %59 in 0 : vector<8x1xf32>, vector<8x1xf32>, vector<8x1xf32>, vector<8x1xf32> -> vector<32x1xf32>
    %87 = tpu.concatenate %60, %60, %60, %60 in 0 : vector<8x1xf32>, vector<8x1xf32>, vector<8x1xf32>, vector<8x1xf32> -> vector<32x1xf32>
    %c0_44 = arith.constant 0 : index
    %c0_45 = arith.constant 0 : index
    %88 = vector.load %arg11[%c0_44, %c0_45] : memref<32x1xf32, #tpu.memory_space<vmem>>, vector<32x1xf32>
    %89 = arith.mulf %88, %86 : vector<32x1xf32>
    %90 = arith.addf %89, %84 : vector<32x1xf32>
    %c0_46 = arith.constant 0 : index
    %c0_47 = arith.constant 0 : index
    %91 = vector.load %arg11[%c0_46, %c0_47] : memref<32x1xf32, #tpu.memory_space<vmem>>, vector<32x1xf32>
    tpu.vector_store %arg11[%c0_46, %c0_47], %90 {strides = array<i32>} : memref<32x1xf32, #tpu.memory_space<vmem>>, vector<32x1xf32>,
    %c0_48 = arith.constant 0 : index
    %c0_49 = arith.constant 0 : index
    %92 = vector.load %arg12[%c0_48, %c0_49] : memref<32x1xf32, #tpu.memory_space<vmem>>, vector<32x1xf32>
    %93 = arith.mulf %92, %87 : vector<32x1xf32>
    %94 = arith.addf %93, %85 : vector<32x1xf32>
    %c0_50 = arith.constant 0 : index
    %c0_51 = arith.constant 0 : index
    %95 = vector.load %arg12[%c0_50, %c0_51] : memref<32x1xf32, #tpu.memory_space<vmem>>, vector<32x1xf32>
    tpu.vector_store %arg12[%c0_50, %c0_51], %94 {strides = array<i32>} : memref<32x1xf32, #tpu.memory_space<vmem>>, vector<32x1xf32>,
    %c3_i32 = arith.constant 3 : i32
    %96 = arith.cmpi eq, %arg0, %c3_i32 : i32
    %97 = arith.extui %96 : i1 to i32
    %c0_i32_52 = arith.constant 0 : i32
    %98 = arith.cmpi ne, %97, %c0_i32_52 : i32
    scf.if %98 {
      %c0_53 = arith.constant 0 : index
      %c0_54 = arith.constant 0 : index
      %99 = vector.load %arg9[%c0_53, %c0_54] : memref<32x1xf32, #tpu.memory_space<vmem>>, vector<32x1xf32>
      %c0_55 = arith.constant 0 : index
      %c0_56 = arith.constant 0 : index
      %100 = vector.load %arg10[%c0_55, %c0_56] : memref<32x1xf32, #tpu.memory_space<vmem>>, vector<32x1xf32>
      %101 = math.log %100 : vector<32x1xf32>
      %102 = arith.addf %99, %101 : vector<32x1xf32>
      %c0_57 = arith.constant 0 : index
      %c0_58 = arith.constant 0 : index
      %103 = vector.load %arg8[%c0_57, %c0_58] : memref<16x1xf32, #tpu.memory_space<vmem>>, vector<16x1xf32>
      %104 = vector.extract_strided_slice %103 {offsets = [0, 0], sizes = [8, 1], strides = [1, 1]} : vector<16x1xf32> to vector<8x1xf32>
      %105 = tpu.concatenate %104, %104, %104, %104 in 0 : vector<8x1xf32>, vector<8x1xf32>, vector<8x1xf32>, vector<8x1xf32> -> vector<32x1xf32>
      %106 = vector.extract_strided_slice %103 {offsets = [8, 0], sizes = [8, 1], strides = [1, 1]} : vector<16x1xf32> to vector<8x1xf32>
      %107 = tpu.concatenate %106, %106, %106, %106 in 0 : vector<8x1xf32>, vector<8x1xf32>, vector<8x1xf32>, vector<8x1xf32> -> vector<32x1xf32>
      %c0_59 = arith.constant 0 : index
      %c0_60 = arith.constant 0 : index
      %108 = vector.load %arg11[%c0_59, %c0_60] : memref<32x1xf32, #tpu.memory_space<vmem>>, vector<32x1xf32>
      %109 = arith.divf %108, %105 : vector<32x1xf32>
      %c0_61 = arith.constant 0 : index
      %c0_62 = arith.constant 0 : index
      %110 = vector.load %arg12[%c0_61, %c0_62] : memref<32x1xf32, #tpu.memory_space<vmem>>, vector<32x1xf32>
      %111 = arith.divf %110, %107 : vector<32x1xf32>
      %112 = arith.addf %109, %111 : vector<32x1xf32>
      %113 = tpu.iota {dimensions = array<i32: 0>} : vector<32x1xi32>
      %c16_i32 = arith.constant 16 : i32
      %114 = vector.broadcast %c16_i32 : i32 to vector<32x1xi32>
      %115 = arith.cmpi slt, %113, %114 : vector<32x1xi32>
      %cst_63 = arith.constant 1.000000e+00 : f32
      %cst_64 = arith.constant 2.000000e+00 : f32
      %116 = vector.broadcast %cst_63 : f32 to vector<32x1xf32>
      %117 = vector.broadcast %cst_64 : f32 to vector<32x1xf32>
      %118 = arith.select %115, %116, %117 : vector<32x1xi1>, vector<32x1xf32>
      %119 = arith.mulf %118, %102 : vector<32x1xf32>
      %120 = arith.subf %119, %112 : vector<32x1xf32>
      %121 = vector.shape_cast %120 : vector<32x1xf32> to vector<1x32x1xf32>
      %cst_65 = arith.constant dense<0.000000e+00> : vector<1xf32>
      %122 = vector.multi_reduction <add>, %121, %cst_65 [1, 2] : vector<1x32x1xf32> to vector<1xf32>
      %123 = vector.shape_cast %122 : vector<1xf32> to vector<1x1x1xf32>
      %124 = vector.extract %123[0, 0, 0] : f32 from vector<1x1x1xf32>
      %cst_66 = arith.constant 0.020833334 : f32
      %125 = arith.mulf %124, %cst_66 : f32
      %c0_67 = arith.constant 0 : index
      %c0_68 = arith.constant 0 : index
      %126 = memref.load %arg5[%c0_67, %c0_68] : memref<1x1xf32, #tpu.memory_space<smem>>
      memref.store %125, %arg5[%c0_67, %c0_68] : memref<1x1xf32, #tpu.memory_space<smem>>
    } else {
    }
    return
  }
  func.func @transform_0(%arg0: i32) -> i32 {
    %c0_i32 = arith.constant 0 : i32
    %c0_i32_0 = arith.constant 0 : i32
    return %c0_i32 : i32
  }
  func.func @transform_1(%arg0: i32) -> (i32, i32) {
    %c0_i32 = arith.constant 0 : i32
    %c0_i32_0 = arith.constant 0 : i32
    return %c0_i32, %arg0 : i32, i32
  }
  func.func @transform_2(%arg0: i32) -> (i32, i32) {
    %c0_i32 = arith.constant 0 : i32
    %c0_i32_0 = arith.constant 0 : i32
    return %c0_i32, %arg0 : i32, i32
  }
  func.func @transform_3(%arg0: i32) -> (i32, i32) {
    %c0_i32 = arith.constant 0 : i32
    %c0_i32_0 = arith.constant 0 : i32
    return %c0_i32, %arg0 : i32, i32
  }
  func.func @transform_4(%arg0: i32) -> (i32, i32) {
    %c0_i32 = arith.constant 0 : i32
    %c0_i32_0 = arith.constant 0 : i32
    %c0_i32_1 = arith.constant 0 : i32
    return %c0_i32, %c0_i32_0 : i32, i32
  }
  func.func @transform_5(%arg0: i32) -> (i32, i32) {
    %c0_i32 = arith.constant 0 : i32
    %c0_i32_0 = arith.constant 0 : i32
    return %c0_i32, %arg0 : i32, i32
  }
}

</mosaic_0001>

<llo_original>
// kernel: tpu_custom_call.1
$region0: #{tpu_custom_call.1}
  #allocation0 [shape = 'u32[]', space=smem, size = 0x4, offset = 0x4, fixed_abs, tag = 'smem constant byte address 0x4 - core index']
  #allocation1 [shape = 'u32[144,128]{1,0:T(1,128)}', space=vmem, size = 0x12000, scoped, tag = 'internal scratch']
  #allocation2 [shape = 'f32[16,1]{1,0:T(8,128)}', space=vmem, size = 0x2000, scoped, tag = 'scratch operand']
  #allocation3 [shape = 'f32[16,1]{1,0:T(8,128)}', space=vmem, size = 0x2000, scoped, tag = 'scratch operand']
  #allocation4 [shape = 'f32[32,1]{1,0:T(8,128)}', space=vmem, size = 0x4000, scoped, tag = 'scratch operand']
  #allocation5 [shape = 'f32[32,1]{1,0:T(8,128)}', space=vmem, size = 0x4000, scoped, tag = 'scratch operand']
  #allocation6 [shape = 'f32[32,1]{1,0:T(8,128)}', space=vmem, size = 0x4000, scoped, tag = 'scratch operand']
  #allocation7 [shape = 'f32[32,1]{1,0:T(8,128)}', space=vmem, size = 0x4000, scoped, tag = 'scratch operand']
  #allocation8 [shape = 'f32[1]{0:T(128)S(6)}', space=smem, size = 0x200, scoped, tag = 'scoped memory for tpu_custom_call.1']
  %s0 = inlined_call_operand.<no memory space> [shape: f32[1], index: 0, kind: input, shape index: {}]
  %s1 = inlined_call_operand.hbm [shape: f32[16,512], index: 1, kind: input, shape index: {}]
  %s2 = inlined_call_operand.hbm [shape: f32[1,512], index: 2, kind: input, shape index: {}]
  %s3 = inlined_call_operand.hbm [shape: f32[32,512], index: 3, kind: input, shape index: {}]
  %s4 = inlined_call_operand.hbm [shape: f32[1,1], index: 4, kind: output, shape index: {0}]
  %s5 = inlined_call_operand.hbm [shape: f32[1,512], index: 5, kind: output, shape index: {1}]
  %6 = xla_tuple %s4, %s5
  %s7 = sld [smem:[#allocation0]]
  $region77: #{tpu_custom_call.1} parent=0
    _
  %s9 = ssub.s32 1, %s7
  %s10 = scalar_select 0, %s9, %s7
  %11 = sst [smem:[#allocation8]] %s0
  $region1: #{tpu_custom_call.1} parent=0
    #allocation9 [shape = 'u8[16384]{0}', space=vmem, size = 0x4000, scoped, tag = 'input window, operand 1']
    #allocation10 [shape = 's32[2]{0}', space=sflag, size = 0x8, scoped, tag = 'scoped memory for tpu_custom_call.1']
    #allocation11 [shape = 's32[2]{0}', space=sflag, size = 0x8, scoped, tag = 'scoped memory for tpu_custom_call.1']
    #allocation12 [shape = 's32[2]{0}', space=sflag, size = 0x8, scoped, tag = 'scoped memory for tpu_custom_call.1']
    #allocation13 [shape = 'u8[1024]{0}', space=vmem, size = 0x400, scoped, tag = 'input window, operand 2']
    #allocation14 [shape = 's32[2]{0}', space=sflag, size = 0x8, scoped, tag = 'scoped memory for tpu_custom_call.1']
    #allocation15 [shape = 'u8[32768]{0}', space=vmem, size = 0x8000, scoped, tag = 'input window, operand 3']
    #allocation16 [shape = 'u8[512]{0}', space=smem, size = 0x200, scoped, tag = 'output window, operand 0, single buffered']
    #allocation17 [shape = 'u8[1024]{0}', space=vmem, size = 0x400, scoped, tag = 'output window, operand 1']
    %12 = vsyncpa [#allocation10], 0
    %s13 = scalar_lea.sflag [#allocation10], 1
    %14 = vsyncpa %s13, 0
    %15 = vsyncpa [#allocation14], 0
    %s16 = scalar_lea.sflag [#allocation14], 1
    %17 = vsyncpa %s16, 0
    %18 = vsyncpa [#allocation12], 0
    %19 = vsyncpa [#allocation11], 0
    %s20 = scalar_lea.sflag [#allocation11], 1
    %21 = vsyncpa %s20, 0
    loop: start=0, step=1, limit=6
    $region2: #{tpu_custom_call.1} parent=1 // loop_pre_header
      _
    $region3: #{tpu_custom_call.1} parent=1 // loop_header
      %s23 = sphi 0, %s27
      %p24 = scmp.ge.s32.totalorder %s23, 6
      %s31 = sphi 0, %s31
      %s33 = sphi 0, %s31
      %s34 = sphi 0, %s33
      %s48 = sphi 0, %s34
      %s54 = sphi 0, %s56
      %s57 = sphi 0, %s54
      %s58 = sphi 0, %s57
      %s74 = sphi 0, %s58
      %s80 = sphi 0, %s82
      %s83 = sphi 0, %s80
      %s84 = sphi 0, %s83
      %s100 = sphi 0, %s84
      %s106 = sphi 0, %s108
      %s109 = sphi 0, %s106
      %s110 = sphi 0, %s109
      %s126 = sphi 0, %s110
      %s130 = sphi 0, %s130
      %s132 = sphi 0, %s130
      %s133 = sphi 0, %s132
      %s147 = sphi 0, %s133
      %s153 = sphi 0, %s155
      %s156 = sphi 0, %s153
      %s157 = sphi 0, %s156
      %s173 = sphi 0, %s157
    $region4: #{tpu_custom_call.1} parent=1 // loop_header_branch
      %26 = sbr.rel (%p24) target = $region8
    $region5: #{tpu_custom_call.1} parent=1 // loop_body
      %s28 = ssub.s32 %s23, 1
      %s29 = ssub.s32 %s23, 2
      %s30 = sadd.s32 %s23, 1
      %s32 = sadd.s32 %s31, 1
      %p35 = scmp.eq.s32.totalorder %s23, 3
      %p36 = scmp.ne.s32.totalorder %s31, %s33
      %p37 = scmp.eq.s32.totalorder %s23, 0
      %p38 = por %p36, %p37
      %p39 = scmp.ne.s32.totalorder %s31, %s33
      %p40 = scmp.eq.s32.totalorder %s28, 3
      %p41 = por %p39, %p40
      %p42 = scmp.ne.s32.totalorder %s33, %s34
      %p43 = scmp.eq.s32.totalorder %s28, 0
      %p44 = por %p42, %p43
      %p45 = scmp.ne.s32.totalorder %s33, %s34
      %p46 = scmp.eq.s32.totalorder %s29, 3
      %p47 = por %p45, %p46
      %p49 = scmp.ne.s32.totalorder %s34, %s48
      %p50 = scmp.eq.s32.totalorder %s29, 0
      %p51 = por %p49, %p50
      %s52 = ssub.s32 %s23, %s30
      %p53 = scmp.eq.s32.totalorder %s52, 0
      %s55 = sadd.s32 %s54, 1
      %s56 = scalar_select %p53, %s54, %s55
      %p59 = pneg %p53
      %p60 = scmp.eq.s32.totalorder %s23, 3
      %p61 = por %p59, %p60
      %p62 = scmp.ne.s32.totalorder %s54, %s57
      %p63 = scmp.eq.s32.totalorder %s23, 0
      %p64 = por %p62, %p63
      %p65 = scmp.ne.s32.totalorder %s54, %s57
      %p66 = scmp.eq.s32.totalorder %s28, 3
      %p67 = por %p65, %p66
      %p68 = scmp.ne.s32.totalorder %s57, %s58
      %p69 = scmp.eq.s32.totalorder %s28, 0
      %p70 = por %p68, %p69
      %p71 = scmp.ne.s32.totalorder %s57, %s58
      %p72 = scmp.eq.s32.totalorder %s29, 3
      %p73 = por %p71, %p72
      %p75 = scmp.ne.s32.totalorder %s58, %s74
      %p76 = scmp.eq.s32.totalorder %s29, 0
      %p77 = por %p75, %p76
      %s78 = ssub.s32 %s23, %s30
      %p79 = scmp.eq.s32.totalorder %s78, 0
      %s81 = sadd.s32 %s80, 1
      %s82 = scalar_select %p79, %s80, %s81
      %p85 = pneg %p79
      %p86 = scmp.eq.s32.totalorder %s23, 3
      %p87 = por %p85, %p86
      %p88 = scmp.ne.s32.totalorder %s80, %s83
      %p89 = scmp.eq.s32.totalorder %s23, 0
      %p90 = por %p88, %p89
      %p91 = scmp.ne.s32.totalorder %s80, %s83
      %p92 = scmp.eq.s32.totalorder %s28, 3
      %p93 = por %p91, %p92
      %p94 = scmp.ne.s32.totalorder %s83, %s84
      %p95 = scmp.eq.s32.totalorder %s28, 0
      %p96 = por %p94, %p95
      %p97 = scmp.ne.s32.totalorder %s83, %s84
      %p98 = scmp.eq.s32.totalorder %s29, 3
      %p99 = por %p97, %p98
      %p101 = scmp.ne.s32.totalorder %s84, %s100
      %p102 = scmp.eq.s32.totalorder %s29, 0
      %p103 = por %p101, %p102
      %s104 = ssub.s32 %s23, %s30
      %p105 = scmp.eq.s32.totalorder %s104, 0
      %s107 = sadd.s32 %s106, 1
      %s108 = scalar_select %p105, %s106, %s107
      %p111 = pneg %p105
      %p112 = scmp.eq.s32.totalorder %s23, 3
      %p113 = por %p111, %p112
      %p114 = scmp.ne.s32.totalorder %s106, %s109
      %p115 = scmp.eq.s32.totalorder %s23, 0
      %p116 = por %p114, %p115
      %p117 = scmp.ne.s32.totalorder %s106, %s109
      %p118 = scmp.eq.s32.totalorder %s28, 3
      %p119 = por %p117, %p118
      %p120 = scmp.ne.s32.totalorder %s109, %s110
      %p121 = scmp.eq.s32.totalorder %s28, 0
      %p122 = por %p120, %p121
      %p123 = scmp.ne.s32.totalorder %s109, %s110
      %p124 = scmp.eq.s32.totalorder %s29, 3
      %p125 = por %p123, %p124
      %p127 = scmp.ne.s32.totalorder %s110, %s126
      %p128 = scmp.eq.s32.totalorder %s29, 0
      %p129 = por %p127, %p128
      %s131 = sadd.s32 %s130, 1
      %p134 = scmp.eq.s32.totalorder %s23, 3
      %p135 = scmp.ne.s32.totalorder %s130, %s132
      %p136 = scmp.eq.s32.totalorder %s23, 0
      %p137 = por %p135, %p136
      %p138 = scmp.ne.s32.totalorder %s130, %s132
      %p139 = scmp.eq.s32.totalorder %s28, 3
      %p140 = por %p138, %p139
      %p141 = scmp.ne.s32.totalorder %s132, %s133
      %p142 = scmp.eq.s32.totalorder %s28, 0
      %p143 = por %p141, %p142
      %p144 = scmp.ne.s32.totalorder %s132, %s133
      %p145 = scmp.eq.s32.totalorder %s29, 3
      %p146 = por %p144, %p145
      %p148 = scmp.ne.s32.totalorder %s133, %s147
      %p149 = scmp.eq.s32.totalorder %s29, 0
      %p150 = por %p148, %p149
      %s151 = ssub.s32 %s23, %s30
      %p152 = scmp.eq.s32.totalorder %s151, 0
      %s154 = sadd.s32 %s153, 1
      %s155 = scalar_select %p152, %s153, %s154
      %p158 = pneg %p152
      %p159 = scmp.eq.s32.totalorder %s23, 3
      %p160 = por %p158, %p159
      %p161 = scmp.ne.s32.totalorder %s153, %s156
      %p162 = scmp.eq.s32.totalorder %s23, 0
      %p163 = por %p161, %p162
      %p164 = scmp.ne.s32.totalorder %s153, %s156
      %p165 = scmp.eq.s32.totalorder %s28, 3
      %p166 = por %p164, %p165
      %p167 = scmp.ne.s32.totalorder %s156, %s157
      %p168 = scmp.eq.s32.totalorder %s28, 0
      %p169 = por %p167, %p168
      %p170 = scmp.ne.s32.totalorder %s156, %s157
      %p171 = scmp.eq.s32.totalorder %s29, 3
      %p172 = por %p170, %p171
      %p174 = scmp.ne.s32.totalorder %s157, %s173
      %p175 = scmp.eq.s32.totalorder %s29, 0
      %p176 = por %p174, %p175
      %p177 = scmp.le.s32.totalorder 1, %s23
      %p178 = scmp.lt.s32.totalorder %s23, 5
      %p179 = pnand %p177, %p178
      %p180 = pneg %p179
      // Predicated region
      $region9: #{tpu_custom_call.1} parent=5 // pred_check
        _
      $region10: #{tpu_custom_call.1} parent=5 // pred_check_branch
        %182 = sbr.rel (%p179) target = $region12
      $region11: #{tpu_custom_call.1} parent=5 // pred_region
        %s183 = ssub.s32 %s23, 1
        // Predicated region
        $region13: #{tpu_custom_call.1} parent=11 // pred_check
          %p184 = pneg %p44
        $region14: #{tpu_custom_call.1} parent=11 // pred_check_branch
          %186 = sbr.rel (%p184) target = $region16
        $region15: #{tpu_custom_call.1} parent=11 // pred_region
          _
        $region16: #{tpu_custom_call.1} parent=11 // pred_fallthru
          _
      $region12: #{tpu_custom_call.1} parent=5 // pred_fallthru
        _
      %p187 = scmp.lt.s32.totalorder %s23, 4
      // Predicated region
      $region17: #{tpu_custom_call.1} parent=5 // pred_check
        %p188 = pneg %p187
      $region18: #{tpu_custom_call.1} parent=5 // pred_check_branch
        %190 = sbr.rel (%p188) target = $region20
      $region19: #{tpu_custom_call.1} parent=5 // pred_region
        // Predicated region
        $region21: #{tpu_custom_call.1} parent=19 // pred_check
          %p191 = pneg %p64
        $region22: #{tpu_custom_call.1} parent=19 // pred_check_branch
          %193 = sbr.rel (%p191) target = $region24
        $region23: #{tpu_custom_call.1} parent=19 // pred_region
          %s194 = sand.u32 %s54, 1
          %s195 = scalar_lea.sflag [#allocation10], %s194
          %s196 = sand.u32 %s54, 1
          %s197 = smul.addr %s196, 16
          %s198 = scalar_lea.vmem [#allocation9], %s197
          %s200 = ssub.s32 256, 256
          %201 = vsyncadd %s195, %s200
          %s202 = smul.addr %s23, 128
          %s203 = scalar_lea.hbm %s1, %s202
          %s204 = sshll.u32 %s198, 4
          %s205 = int_to_ptr.vmem [resolvable:$true] %s204
          %210 = dma.hbm_to_vmem [thread:$0]  %s203, 256, %s205, %s195, 512, 128, 8
        $region24: #{tpu_custom_call.1} parent=19 // pred_fallthru
          _
        // Predicated region
        $region25: #{tpu_custom_call.1} parent=19 // pred_check
          %p211 = pneg %p90
        $region26: #{tpu_custom_call.1} parent=19 // pred_check_branch
          %213 = sbr.rel (%p211) target = $region28
        $region27: #{tpu_custom_call.1} parent=19 // pred_region
          %s214 = sand.u32 %s23, 1
          %s215 = scalar_lea.sflag [#allocation14], %s214
          %s216 = sand.u32 %s80, 1
          %s217 = scalar_lea.vmem [#allocation13], %s216
          %s219 = ssub.s32 16, 16
          %220 = vsyncadd %s215, %s219
          %s221 = smul.addr %s23, 16
          %s222 = scalar_lea.hbm %s2, %s221
          %s224 = sshll.u32 %s217, 4
          %s225 = int_to_ptr.vmem [resolvable:$true] %s224
          %227 = dma.hbm_to_vmem [thread:$0]  %s222, 16, %s225, %s215
        $region28: #{tpu_custom_call.1} parent=19 // pred_fallthru
          _
        // Predicated region
        $region29: #{tpu_custom_call.1} parent=19 // pred_check
          %p228 = pneg %p116
        $region30: #{tpu_custom_call.1} parent=19 // pred_check_branch
          %230 = sbr.rel (%p228) target = $region32
        $region31: #{tpu_custom_call.1} parent=19 // pred_region
          %s231 = sand.u32 %s23, 1
          %s232 = scalar_lea.sflag [#allocation14], %s231
          %s233 = sand.u32 %s106, 1
          %s234 = smul.addr %s233, 32
          %s235 = scalar_lea.vmem [#allocation15], %s234
          %s237 = ssub.s32 512, 512
          %238 = vsyncadd %s232, %s237
          %s239 = smul.addr %s23, 128
          %s240 = scalar_lea.hbm %s3, %s239
          %s241 = sshll.u32 %s235, 4
          %s242 = int_to_ptr.vmem [resolvable:$true] %s241
          %247 = dma.hbm_to_vmem [thread:$0]  %s240, 512, %s242, %s232, 512, 128, 8
        $region32: #{tpu_custom_call.1} parent=19 // pred_fallthru
          _
      $region20: #{tpu_custom_call.1} parent=5 // pred_fallthru
        _
      %p248 = scmp.le.s32.totalorder 1, %s23
      %p249 = scmp.lt.s32.totalorder %s23, 5
      %p250 = pnand %p248, %p249
      %p251 = pneg %p250
      // Predicated region
      $region33: #{tpu_custom_call.1} parent=5 // pred_check
        _
      $region34: #{tpu_custom_call.1} parent=5 // pred_check_branch
        %253 = sbr.rel (%p250) target = $region36
      $region35: #{tpu_custom_call.1} parent=5 // pred_region
        %s254 = ssub.s32 %s23, 1
        %s255 = sand.u32 %s57, 1
        %s256 = scalar_lea.sflag [#allocation10], %s255
        %s257 = sand.u32 %s57, 1
        %s258 = smul.addr %s257, 16
        %s259 = scalar_lea.vmem [#allocation9], %s258
        // Predicated region
        $region37: #{tpu_custom_call.1} parent=35 // pred_check
          %p260 = pneg %p70
        $region38: #{tpu_custom_call.1} parent=35 // pred_check_branch
          %262 = sbr.rel (%p260) target = $region40
        $region39: #{tpu_custom_call.1} parent=35 // pred_region
          %263 = dma.done %s256, 256
        $region40: #{tpu_custom_call.1} parent=35 // pred_fallthru
          _
        %s264 = sand.u32 %s28, 1
        %s265 = scalar_lea.sflag [#allocation14], %s264
        %s266 = sand.u32 %s83, 1
        %s267 = scalar_lea.vmem [#allocation13], %s266
        // Predicated region
        $region41: #{tpu_custom_call.1} parent=35 // pred_check
          %p268 = pneg %p96
        $region42: #{tpu_custom_call.1} parent=35 // pred_check_branch
          %270 = sbr.rel (%p268) target = $region44
        $region43: #{tpu_custom_call.1} parent=35 // pred_region
          %271 = dma.done %s265, 16
        $region44: #{tpu_custom_call.1} parent=35 // pred_fallthru
          _
        %s272 = sand.u32 %s28, 1
        %s273 = scalar_lea.sflag [#allocation14], %s272
        %s274 = sand.u32 %s109, 1
        %s275 = smul.addr %s274, 32
        %s276 = scalar_lea.vmem [#allocation15], %s275
        // Predicated region
        $region45: #{tpu_custom_call.1} parent=35 // pred_check
          %p277 = pneg %p122
        $region46: #{tpu_custom_call.1} parent=35 // pred_check_branch
          %279 = sbr.rel (%p277) target = $region48
        $region47: #{tpu_custom_call.1} parent=35 // pred_region
          %280 = dma.done %s273, 512
        $region48: #{tpu_custom_call.1} parent=35 // pred_fallthru
          _
        %p281 = pneg %p44
        %p282 = pneg %p41
        %s283 = sand.u32 %s57, 1
        %s284 = scalar_lea.sflag [#allocation10], %s283
        %s285 = sand.u32 %s57, 1
        %s286 = smul.addr %s285, 16
        %s287 = scalar_lea.vmem [#allocation9], %s286
        %p288 = pneg %p70
        %p289 = pneg %p67
        %s290 = sand.u32 %s28, 1
        %s291 = scalar_lea.sflag [#allocation14], %s290
        %s292 = sand.u32 %s83, 1
        %s293 = scalar_lea.vmem [#allocation13], %s292
        %p294 = pneg %p96
        %p295 = pneg %p93
        %s296 = sand.u32 %s28, 1
        %s297 = scalar_lea.sflag [#allocation14], %s296
        %s298 = sand.u32 %s109, 1
        %s299 = smul.addr %s298, 32
        %s300 = scalar_lea.vmem [#allocation15], %s299
        %p301 = pneg %p122
        %p302 = pneg %p119
        %p303 = pneg %p143
        %p304 = pneg %p140
        %p305 = pneg %p169
        %p306 = pneg %p166
        %s307 = sand.u32 %s156, 1
        %s308 = scalar_lea.sflag [#allocation11], %s307
        %s309 = sand.u32 %s156, 1
        %s310 = scalar_lea.vmem [#allocation17], %s309
        %p311 = scmp.eq.s32.totalorder %s28, 0
        // Predicated region
        $region49: #{tpu_custom_call.1} parent=35 // pred_check
          %p312 = pneg %p311
        $region50: #{tpu_custom_call.1} parent=35 // pred_check_branch
          %314 = sbr.rel (%p312) target = $region52
        $region51: #{tpu_custom_call.1} parent=35 // pred_region
          %vm315 = vcmask 7168
          %316 = vst.msk [vmem:[#allocation2] sm:$0xff] %vm315, -inf
          %317 = vst.msk [vmem:[#allocation2 + $0x8] sm:$0xff] %vm315, -inf
          %318 = vst.msk [vmem:[#allocation3] sm:$0xff] %vm315, 0.0
          %319 = vst.msk [vmem:[#allocation3 + $0x8] sm:$0xff] %vm315, 0.0
          %320 = vst.msk [vmem:[#allocation4] sm:$0xff] %vm315, -inf
          %321 = vst.msk [vmem:[#allocation4 + $0x8] sm:$0xff] %vm315, -inf
          %322 = vst.msk [vmem:[#allocation4 + $0x10] sm:$0xff] %vm315, -inf
          %323 = vst.msk [vmem:[#allocation4 + $0x18] sm:$0xff] %vm315, -inf
          %324 = vst.msk [vmem:[#allocation5] sm:$0xff] %vm315, 0.0
          %325 = vst.msk [vmem:[#allocation5 + $0x8] sm:$0xff] %vm315, 0.0
          %326 = vst.msk [vmem:[#allocation5 + $0x10] sm:$0xff] %vm315, 0.0
          %327 = vst.msk [vmem:[#allocation5 + $0x18] sm:$0xff] %vm315, 0.0
          %328 = vst.msk [vmem:[#allocation6] sm:$0xff] %vm315, 0.0
          %329 = vst.msk [vmem:[#allocation6 + $0x8] sm:$0xff] %vm315, 0.0
          %330 = vst.msk [vmem:[#allocation6 + $0x10] sm:$0xff] %vm315, 0.0
          %331 = vst.msk [vmem:[#allocation6 + $0x18] sm:$0xff] %vm315, 0.0
          %332 = vst.msk [vmem:[#allocation7] sm:$0xff] %vm315, 0.0
          %333 = vst.msk [vmem:[#allocation7 + $0x8] sm:$0xff] %vm315, 0.0
          %334 = vst.msk [vmem:[#allocation7 + $0x10] sm:$0xff] %vm315, 0.0
          %335 = vst.msk [vmem:[#allocation7 + $0x18] sm:$0xff] %vm315, 0.0
        $region52: #{tpu_custom_call.1} parent=35 // pred_fallthru
          _
        %s336 = sld [smem:[#allocation8]]
        %v337 = vld [vmem:[%s259] sm:$0xff]
        %v338 = vld [vmem:[%s259 + $0x8] sm:$0xff]
        %v339 = vld [vmem:[%s267] sm:$0x1]
        %v340 = vadd.f32 %v337, %v338
        %v341 = vrot.slane %v340, 4
        %v342 = vadd.f32 %v340, %v341
        %v343 = vrot.slane %v342, 2
        %v344 = vadd.f32 %v342, %v343
        %v345 = vrot.slane %v344, 1
        %v346 = vadd.f32 %v344, %v345
        %v347 = vmul.f32 %v346, 0.0625
        %v348 = vmul.f32 %v339, 0.9
        %v349 = vmul.f32 %v347, 0.1
        %v350 = vadd.f32 %v348, %v349
        %351 = vst [vmem:[%s310] sm:$0x1] %v350
        %v353 = vlaneseq
        %v354 = vshrl.u32 %v353, 7
        %v355 = vsub.s32 0, %v354
        %v356 = vrot.slane %v339, %v355
        %v358 = vsub.f32 %v337, %v356
        %v359 = vsub.f32 %v338, %v356
        %v360 = vstv %s336
        %v361 = vmul.f32 %v358, %v360
        %v362 = vmul.f32 %v359, %v360
        %363 = vmax.xlane.f32.xlu0 %v361
        %v364 = vpop.xlane.xlu0 %363
        %365 = vmax.xlane.f32.xlu0 %v362
        %v366 = vpop.xlane.xlu0 %365
        %v367 = vld [vmem:[#allocation2] sm:$0xff]
        %v368 = vld [vmem:[#allocation2 + $0x8] sm:$0xff]
        %v369 = vmax.f32 %v367, %v364
        %v370 = vmax.f32 %v368, %v366
        %v371 = vsub.f32 %v367, %v369
        %v372 = vsub.f32 %v368, %v370
        %v373 = vmul.f32 %v371, 1.442695
        %v374 = vpow.pop %v373
        %v375 = vmul.f32 %v372, 1.442695
        %v376 = vpow.pop %v375
        %378 = vset.pattern.permute.xlu0 0
        %379 = vperm.xlu0 %378, %v369
        %v380 = vpop.permute.xlu0 %379
        %383 = vset.pattern.permute.xlu0 0
        %384 = vperm.xlu0 %383, %v370
        %v385 = vpop.permute.xlu0 %384
        %v387 = vsub.f32 %v361, %v380
        %v388 = vsub.f32 %v362, %v385
        %v389 = vmul.f32 %v387, 1.442695
        %v390 = vpow.pop %v389
        %v391 = vmul.f32 %v388, 1.442695
        %v392 = vpow.pop %v391
        %v393 = vld [vmem:[#allocation3] sm:$0xff]
        %v394 = vld [vmem:[#allocation3 + $0x8] sm:$0xff]
        %v395 = vmul.f32 %v393, %v374
        %v396 = vmul.f32 %v394, %v376
        %397 = vadd.xlane.f32.xlu0 %v390
        %v398 = vpop.xlane.xlu0 %397
        %399 = vadd.xlane.f32.xlu0 %v392
        %v400 = vpop.xlane.xlu0 %399
        %v401 = vadd.f32 %v395, %v398
        %v402 = vadd.f32 %v396, %v400
        %vm403 = vcmask 7168
        %404 = vst.msk [vmem:[#allocation3] sm:$0xff] %vm403, %v401
        %405 = vst.msk [vmem:[#allocation3 + $0x8] sm:$0xff] %vm403, %v402
        %406 = vst.msk [vmem:[#allocation2] sm:$0xff] %vm403, %v369
        %407 = vst.msk [vmem:[#allocation2 + $0x8] sm:$0xff] %vm403, %v370
        %v408 = vld [vmem:[%s276] sm:$0xff]
        %v409 = vld [vmem:[%s276 + $0x8] sm:$0xff]
        %v410 = vld [vmem:[%s276 + $0x10] sm:$0xff]
        %v411 = vld [vmem:[%s276 + $0x18] sm:$0xff]
        %v412 = vmul.f32 %v408, 10.0
        %v413 = vmul.f32 %v409, 10.0
        %v414 = vmul.f32 %v410, 10.0
        %v415 = vmul.f32 %v411, 10.0
        %416 = vmax.xlane.f32.xlu0 %v412
        %v417 = vpop.xlane.xlu0 %416
        %418 = vmax.xlane.f32.xlu0 %v413
        %v419 = vpop.xlane.xlu0 %418
        %420 = vmax.xlane.f32.xlu0 %v414
        %v421 = vpop.xlane.xlu0 %420
        %422 = vmax.xlane.f32.xlu0 %v415
        %v423 = vpop.xlane.xlu0 %422
        %v424 = vld [vmem:[#allocation4] sm:$0xff]
        %v425 = vld [vmem:[#allocation4 + $0x8] sm:$0xff]
        %v426 = vld [vmem:[#allocation4 + $0x10] sm:$0xff]
        %v427 = vld [vmem:[#allocation4 + $0x18] sm:$0xff]
        %v428 = vmax.f32 %v424, %v417
        %v429 = vmax.f32 %v425, %v419
        %v430 = vmax.f32 %v426, %v421
        %v431 = vmax.f32 %v427, %v423
        %v432 = vld [vmem:[#allocation5] sm:$0xff]
        %v433 = vld [vmem:[#allocation5 + $0x8] sm:$0xff]
        %v434 = vld [vmem:[#allocation5 + $0x10] sm:$0xff]
        %v435 = vld [vmem:[#allocation5 + $0x18] sm:$0xff]
        %v436 = vsub.f32 %v424, %v428
        %v437 = vsub.f32 %v425, %v429
        %v438 = vsub.f32 %v426, %v430
        %v439 = vsub.f32 %v427, %v431
        %v440 = vmul.f32 %v436, 1.442695
        %v441 = vpow.pop %v440
        %v442 = vmul.f32 %v437, 1.442695
        %v443 = vpow.pop %v442
        %v444 = vmul.f32 %v438, 1.442695
        %v445 = vpow.pop %v444
        %v446 = vmul.f32 %v439, 1.442695
        %v447 = vpow.pop %v446
        %v448 = vmul.f32 %v432, %v441
        %v449 = vmul.f32 %v433, %v443
        %v450 = vmul.f32 %v434, %v445
        %v451 = vmul.f32 %v435, %v447
        %453 = vset.pattern.permute.xlu0 0
        %454 = vperm.xlu0 %453, %v428
        %v455 = vpop.permute.xlu0 %454
        %458 = vset.pattern.permute.xlu0 0
        %459 = vperm.xlu0 %458, %v429
        %v460 = vpop.permute.xlu0 %459
        %463 = vset.pattern.permute.xlu0 0
        %464 = vperm.xlu0 %463, %v430
        %v465 = vpop.permute.xlu0 %464
        %468 = vset.pattern.permute.xlu0 0
        %469 = vperm.xlu0 %468, %v431
        %v470 = vpop.permute.xlu0 %469
        %v472 = vsub.f32 %v412, %v455
        %v473 = vsub.f32 %v413, %v460
        %v474 = vsub.f32 %v414, %v465
        %v475 = vsub.f32 %v415, %v470
        %v476 = vmul.f32 %v472, 1.442695
        %v477 = vpow.pop %v476
        %v478 = vmul.f32 %v473, 1.442695
        %v479 = vpow.pop %v478
        %v480 = vmul.f32 %v474, 1.442695
        %v481 = vpow.pop %v480
        %v482 = vmul.f32 %v475, 1.442695
        %v483 = vpow.pop %v482
        %484 = vadd.xlane.f32.xlu0 %v477
        %v485 = vpop.xlane.xlu0 %484
        %486 = vadd.xlane.f32.xlu0 %v479
        %v487 = vpop.xlane.xlu0 %486
        %488 = vadd.xlane.f32.xlu0 %v481
        %v489 = vpop.xlane.xlu0 %488
        %490 = vadd.xlane.f32.xlu0 %v483
        %v491 = vpop.xlane.xlu0 %490
        %v492 = vadd.f32 %v448, %v485
        %v493 = vadd.f32 %v449, %v487
        %v494 = vadd.f32 %v450, %v489
        %v495 = vadd.f32 %v451, %v491
        %496 = vst.msk [vmem:[#allocation5] sm:$0xff] %vm403, %v492
        %497 = vst.msk [vmem:[#allocation5 + $0x8] sm:$0xff] %vm403, %v493
        %498 = vst.msk [vmem:[#allocation5 + $0x10] sm:$0xff] %vm403, %v494
        %499 = vst.msk [vmem:[#allocation5 + $0x18] sm:$0xff] %vm403, %v495
        %500 = vst.msk [vmem:[#allocation4] sm:$0xff] %vm403, %v428
        %501 = vst.msk [vmem:[#allocation4 + $0x8] sm:$0xff] %vm403, %v429
        %502 = vst.msk [vmem:[#allocation4 + $0x10] sm:$0xff] %vm403, %v430
        %503 = vst.msk [vmem:[#allocation4 + $0x18] sm:$0xff] %vm403, %v431
        %v504 = vmul.f32 %v392, %v412
        %505 = vadd.xlane.f32.xlu0 %v504
        %v506 = vpop.xlane.xlu0 %505
        %v507 = vmul.f32 %v390, %v413
        %508 = vadd.xlane.f32.xlu0 %v507
        %v509 = vpop.xlane.xlu0 %508
        %v510 = vmul.f32 %v390, %v414
        %511 = vadd.xlane.f32.xlu0 %v510
        %v512 = vpop.xlane.xlu0 %511
        %v513 = vmul.f32 %v392, %v414
        %514 = vadd.xlane.f32.xlu0 %v513
        %v515 = vpop.xlane.xlu0 %514
        %v516 = vmul.f32 %v390, %v415
        %517 = vadd.xlane.f32.xlu0 %v516
        %v518 = vpop.xlane.xlu0 %517
        %v519 = vmul.f32 %v392, %v415
        %520 = vadd.xlane.f32.xlu0 %v519
        %v521 = vpop.xlane.xlu0 %520
        %v522 = vld [vmem:[#allocation6] sm:$0xff]
        %v523 = vld [vmem:[#allocation6 + $0x8] sm:$0xff]
        %v524 = vld [vmem:[#allocation6 + $0x10] sm:$0xff]
        %v525 = vld [vmem:[#allocation6 + $0x18] sm:$0xff]
        %v526 = vmul.f32 %v522, %v374
        %v527 = vmul.f32 %v523, %v374
        %v528 = vmul.f32 %v524, %v374
        %v529 = vmul.f32 %v525, %v374
        %v530 = vadd.f32 %v526, 0.0
        %v531 = vadd.f32 %v527, %v509
        %v532 = vadd.f32 %v528, %v512
        %v533 = vadd.f32 %v529, %v518
        %534 = vst.msk [vmem:[#allocation6] sm:$0xff] %vm403, %v530
        %535 = vst.msk [vmem:[#allocation6 + $0x8] sm:$0xff] %vm403, %v531
        %536 = vst.msk [vmem:[#allocation6 + $0x10] sm:$0xff] %vm403, %v532
        %537 = vst.msk [vmem:[#allocation6 + $0x18] sm:$0xff] %vm403, %v533
        %v538 = vld [vmem:[#allocation7] sm:$0xff]
        %v539 = vld [vmem:[#allocation7 + $0x8] sm:$0xff]
        %v540 = vld [vmem:[#allocation7 + $0x10] sm:$0xff]
        %v541 = vld [vmem:[#allocation7 + $0x18] sm:$0xff]
        %v542 = vmul.f32 %v538, %v376
        %v543 = vmul.f32 %v539, %v376
        %v544 = vmul.f32 %v540, %v376
        %v545 = vmul.f32 %v541, %v376
        %v546 = vadd.f32 %v542, %v506
        %v547 = vadd.f32 %v543, 0.0
        %v548 = vadd.f32 %v544, %v515
        %v549 = vadd.f32 %v545, %v521
        %550 = vst.msk [vmem:[#allocation7] sm:$0xff] %vm403, %v546
        %551 = vst.msk [vmem:[#allocation7 + $0x8] sm:$0xff] %vm403, %v547
        %552 = vst.msk [vmem:[#allocation7 + $0x10] sm:$0xff] %vm403, %v548
        %553 = vst.msk [vmem:[#allocation7 + $0x18] sm:$0xff] %vm403, %v549
        %p554 = scmp.eq.s32.totalorder %s28, 3
        // Predicated region
        $region53: #{tpu_custom_call.1} parent=35 // pred_check
          %p555 = pneg %p554
        $region54: #{tpu_custom_call.1} parent=35 // pred_check_branch
          %557 = sbr.rel (%p555) target = $region56
        $region55: #{tpu_custom_call.1} parent=35 // pred_region
          %v558 = vld [vmem:[#allocation4] sm:$0xff]
          %v559 = vld [vmem:[#allocation4 + $0x8] sm:$0xff]
          %v560 = vld [vmem:[#allocation4 + $0x10] sm:$0xff]
          %v561 = vld [vmem:[#allocation4 + $0x18] sm:$0xff]
          %v562 = vld [vmem:[#allocation5] sm:$0xff]
          %v563 = vld [vmem:[#allocation5 + $0x8] sm:$0xff]
          %v564 = vld [vmem:[#allocation5 + $0x10] sm:$0xff]
          %v565 = vld [vmem:[#allocation5 + $0x18] sm:$0xff]
          %v566 = vlog2.pop %v562
          %v567 = vmul.f32 %v566, 0.6931472
          %v568 = vlog2.pop %v563
          %v569 = vmul.f32 %v568, 0.6931472
          %v570 = vlog2.pop %v564
          %v571 = vmul.f32 %v570, 0.6931472
          %v572 = vlog2.pop %v565
          %v573 = vmul.f32 %v572, 0.6931472
          %v574 = vadd.f32 %v558, %v567
          %v575 = vadd.f32 %v559, %v569
          %v576 = vadd.f32 %v560, %v571
          %v577 = vadd.f32 %v561, %v573
          %v578 = vld [vmem:[#allocation3] sm:$0xff]
          %v579 = vld [vmem:[#allocation3 + $0x8] sm:$0xff]
          %v580 = vld [vmem:[#allocation6] sm:$0xff]
          %v581 = vld [vmem:[#allocation6 + $0x8] sm:$0xff]
          %v582 = vld [vmem:[#allocation6 + $0x10] sm:$0xff]
          %v583 = vld [vmem:[#allocation6 + $0x18] sm:$0xff]
          %v584 = vrcp.pop %v578
          %v585 = vmul.f32 %v580, %v584
          %v586 = vmul.f32 %v581, %v584
          %v587 = vmul.f32 %v582, %v584
          %v588 = vmul.f32 %v583, %v584
          %v589 = vld [vmem:[#allocation7] sm:$0xff]
          %v590 = vld [vmem:[#allocation7 + $0x8] sm:$0xff]
          %v591 = vld [vmem:[#allocation7 + $0x10] sm:$0xff]
          %v592 = vld [vmem:[#allocation7 + $0x18] sm:$0xff]
          %v593 = vrcp.pop %v579
          %v594 = vmul.f32 %v589, %v593
          %v595 = vmul.f32 %v590, %v593
          %v596 = vmul.f32 %v591, %v593
          %v597 = vmul.f32 %v592, %v593
          %v598 = vadd.f32 %v585, %v594
          %v599 = vadd.f32 %v586, %v595
          %v600 = vadd.f32 %v587, %v596
          %v601 = vadd.f32 %v588, %v597
          %v602 = vlaneseq
          %v603 = vshrl.u32 %v602, 7
          %v604 = vadd.s32 %v603, 8
          %v605 = vadd.s32 %v603, 16
          %v606 = vadd.s32 %v603, 24
          %vm607 = vcmp.lt.s32.totalorder %v603, 16
          %vm608 = vcmp.lt.s32.totalorder %v604, 16
          %vm609 = vcmp.lt.s32.totalorder %v605, 16
          %vm610 = vcmp.lt.s32.totalorder %v606, 16
          %v611 = vsel %vm607, 1.0, 2.0
          %v612 = vsel %vm608, 1.0, 2.0
          %v613 = vsel %vm609, 1.0, 2.0
          %v614 = vsel %vm610, 1.0, 2.0
          %v615 = vmul.f32 %v611, %v574
          %v616 = vmul.f32 %v612, %v575
          %v617 = vmul.f32 %v613, %v576
          %v618 = vmul.f32 %v614, %v577
          %v619 = vsub.f32 %v615, %v598
          %v620 = vsub.f32 %v616, %v599
          %v621 = vsub.f32 %v617, %v600
          %v622 = vsub.f32 %v618, %v601
          %v623 = vsel %vm403, %v619, 0.0
          %v624 = vsel %vm403, %v620, 0.0
          %v625 = vadd.f32 %v623, %v624
          %v626 = vsel %vm403, %v621, 0.0
          %v627 = vadd.f32 %v625, %v626
          %v628 = vsel %vm403, %v622, 0.0
          %v629 = vadd.f32 %v627, %v628
          %630 = vadd.xlane.f32.xlu0 %v629
          %v631 = vpop.xlane.xlu0 %630
          %v632 = vrot.slane %v631, 4
          %v633 = vadd.f32 %v631, %v632
          %v634 = vrot.slane %v633, 2
          %v635 = vadd.f32 %v633, %v634
          %v636 = vrot.slane %v635, 1
          %v637 = vadd.f32 %v635, %v636
          %s638 = vtos %v637
          %s639 = smul.f32 %s638, 0.020833334
          %s640 = scalar_lea.smem [#allocation16], 0
          %641 = sst [smem:[%s640]] %s639
        $region56: #{tpu_custom_call.1} parent=35 // pred_fallthru
          _
        %s642 = sand.u32 %s156, 1
        %s643 = scalar_lea.sflag [#allocation11], %s642
        %s644 = sand.u32 %s156, 1
        %s645 = scalar_lea.vmem [#allocation17], %s644
        // Predicated region
        $region57: #{tpu_custom_call.1} parent=35 // pred_check
          %p646 = pneg %p140
        $region58: #{tpu_custom_call.1} parent=35 // pred_check_branch
          %648 = sbr.rel (%p646) target = $region60
        $region59: #{tpu_custom_call.1} parent=35 // pred_region
          %s650 = ssub.s32 16, 16
          %651 = vsyncadd [#allocation12], %s650
          %654 = dma.smem_to_hbm [#allocation16], 16, %s4, [#allocation12]
        $region60: #{tpu_custom_call.1} parent=35 // pred_fallthru
          _
        // Predicated region
        $region61: #{tpu_custom_call.1} parent=35 // pred_check
          %p655 = pneg %p166
        $region62: #{tpu_custom_call.1} parent=35 // pred_check_branch
          %657 = sbr.rel (%p655) target = $region64
        $region63: #{tpu_custom_call.1} parent=35 // pred_region
          %s659 = ssub.s32 16, 16
          %660 = vsyncadd %s643, %s659
          %s661 = smul.addr %s28, 16
          %s662 = scalar_lea.hbm %s5, %s661
          %s664 = sshll.u32 %s645, 4
          %s665 = int_to_ptr.vmem [resolvable:$true] %s664
          %667 = dma.vmem_to_hbm [thread:$0]  %s665, 16, %s662, %s643
        $region64: #{tpu_custom_call.1} parent=35 // pred_fallthru
          _
        // Predicated region
        $region65: #{tpu_custom_call.1} parent=35 // pred_check
          %p668 = pneg %p140
        $region66: #{tpu_custom_call.1} parent=35 // pred_check_branch
          %670 = sbr.rel (%p668) target = $region68
        $region67: #{tpu_custom_call.1} parent=35 // pred_region
          %671 = dma.done [#allocation12], 16
        $region68: #{tpu_custom_call.1} parent=35 // pred_fallthru
          _
        %672 = sfence
      $region36: #{tpu_custom_call.1} parent=5 // pred_fallthru
        _
      %p673 = scmp.le.s32.totalorder 2, %s23
      // Predicated region
      $region69: #{tpu_custom_call.1} parent=5 // pred_check
        %p674 = pneg %p673
      $region70: #{tpu_custom_call.1} parent=5 // pred_check_branch
        %676 = sbr.rel (%p674) target = $region72
      $region71: #{tpu_custom_call.1} parent=5 // pred_region
        %s677 = ssub.s32 %s23, 2
        // Predicated region
        $region73: #{tpu_custom_call.1} parent=71 // pred_check
          %p678 = pneg %p172
        $region74: #{tpu_custom_call.1} parent=71 // pred_check_branch
          %680 = sbr.rel (%p678) target = $region76
        $region75: #{tpu_custom_call.1} parent=71 // pred_region
          %s681 = sand.u32 %s157, 1
          %s682 = scalar_lea.sflag [#allocation11], %s681
          %s683 = sand.u32 %s157, 1
          %s684 = scalar_lea.vmem [#allocation17], %s683
          %685 = dma.done %s682, 16
        $region76: #{tpu_custom_call.1} parent=71 // pred_fallthru
          _
      $region72: #{tpu_custom_call.1} parent=5 // pred_fallthru
        _
    $region6: #{tpu_custom_call.1} parent=1 // loop_footer
      %s27 = sadd.s32 1, %s23
    $region7: #{tpu_custom_call.1} parent=1 // loop_footer_branch
      %22 = sbr.rel target = $region3
    $region8: #{tpu_custom_call.1} parent=1 // loop_exit
      _
    %686 = vsyncpa [#allocation10], 1
    %s687 = scalar_lea.sflag [#allocation10], 1
    %688 = vsyncpa %s687, 1
    %689 = vsyncpa [#allocation14], 1
    %s690 = scalar_lea.sflag [#allocation14], 1
    %691 = vsyncpa %s690, 1
    %692 = vsyncpa [#allocation11], 1
    %s693 = scalar_lea.sflag [#allocation11], 1
    %694 = vsyncpa %s693, 1
    %695 = vsyncpa [#allocation12], 1
    %s696 = scalar_lea.sflag [#allocation12], 1
    %697 = vsyncpa %s696, 1

</llo_original>
